<compile_context>
chip_gen: v6e
topology: v6e:2x2x1
jax: 0.10.0
libtpu: 0.0.40
codegen_flags: <defaults>
</compile_context>

<pallas_src>
import jax
import jax.numpy as jnp
from jax.experimental import pallas as pl
from jax.experimental.pallas import tpu as pltpu


def _encoder_kernel_t(xt_ref, yt_ref, w1xt_ref, w1yt_ref, b1t_ref,
                      wht_ref, bht_ref, outt_ref):
    """Transposed encoder tile (batch is the lane dimension).

      hT   = softplus(W1x^T @ x^T + W1y^T @ y^T + b1^T)   -> (H , tb), f32
      outT = [Wm|Wl]^T @ hT + [bm|bl]^T                    -> (2E, tb), f32
    """
    # Hidden layer (== softplus([x,y] @ W1 + b1), transposed).
    h = jnp.dot(w1xt_ref[...], xt_ref[...], preferred_element_type=jnp.float32)
    h = h + jnp.dot(w1yt_ref[...], yt_ref[...], preferred_element_type=jnp.float32)
    h = h + b1t_ref[...]                                   # (H,1) broadcast, f32
    # Numerically stable softplus, kept in f32 (v5e VPU/EUP have no bf16 path).
    h = jnp.maximum(h, 0.0) + jnp.log1p(jnp.exp(-jnp.abs(h)))

    # Fused heads: one MXU push producing [mean; logvar]^T.
    h = h.astype(wht_ref.dtype)                            # back to compute dtype
    out = jnp.dot(wht_ref[...], h, preferred_element_type=jnp.float32)
    out = out + bht_ref[...]
    outt_ref[...] = out.astype(outt_ref.dtype)


def _pick_tb(B, max_tile=2048):
    """Batch-tile size for the transposed (batch-as-lanes) layout.

    * B <= 256: one full-batch tile (overhead-bound; splitting only adds
      per-step cost).  Block == full array, so no (8,128) constraint.
    * Otherwise: a multiple of 128 (lane alignment for the BlockSpec), sized
      ~B/(2k) and capped at `max_tile`, so the grid has an even number of >=2
      steps and both v7x TensorCores get work via ("parallel",) semantics.
    """
    if B <= 256:
        return B
    pairs = max(1, -(-B // (2 * max_tile)))   # ceil(B / (2*max_tile))
    tb = -(-B // (2 * pairs))                 # ceil(B / (2*pairs))
    tb = -(-tb // 128) * 128                  # round up to a lane multiple
    return tb


def _encoder_pallas(x, y, params, *, compute_dtype, max_tile):
    """Runs the transposed Pallas kernel; returns the fused (2E, B) slab."""
    B, Dx = x.shape
    Dy = y.shape[1]
    w1xt = params["w1x_t"].astype(compute_dtype)   # (H , Dx)
    w1yt = params["w1y_t"].astype(compute_dtype)   # (H , Dy)
    b1t = params["b1_t"]                           # (H , 1)  f32
    wht = params["wh_t"].astype(compute_dtype)     # (2E, H)
    bht = params["bh_t"]                           # (2E, 1)  f32
    H = w1xt.shape[0]
    E2 = wht.shape[0]

    # Layout plumbing: batch -> lane (last) dim so the (2E, tb) output stores
    # are lane-dense.  In a fused pipeline the producer/consumer would hand
    # these tensors over already transposed.
    xt = x.T.astype(compute_dtype)                 # (Dx, B)
    yt = y.T.astype(compute_dtype)                 # (Dy, B)

    tb = _pick_tb(B, max_tile)
    grid = (pl.cdiv(B, tb),)

    itemsize = jnp.dtype(compute_dtype).itemsize
    cost = pl.CostEstimate(
        flops=2 * B * (Dx * H + Dy * H + H * E2),
        transcendentals=2 * B * H,                 # exp + log1p per hidden act
        bytes_accessed=(itemsize * (xt.size + yt.size + w1xt.size
                                    + w1yt.size + wht.size)
                        + 4 * (b1t.size + bht.size + B * E2)),
    )

    out_t = pl.pallas_call(
        _encoder_kernel_t,
        out_shape=jax.ShapeDtypeStruct((E2, B), jnp.float32),
        grid=grid,
        in_specs=[
            pl.BlockSpec((Dx, tb), lambda i: (0, i)),   # x^T  (tiled over batch lanes)
            pl.BlockSpec((Dy, tb), lambda i: (0, i)),   # y^T  (tiled over batch lanes)
            pl.BlockSpec((H, Dx), lambda i: (0, 0)),    # W1x^T   (resident)
            pl.BlockSpec((H, Dy), lambda i: (0, 0)),    # W1y^T   (resident)
            pl.BlockSpec((H, 1), lambda i: (0, 0)),     # b1^T    (resident, f32)
            pl.BlockSpec((E2, H), lambda i: (0, 0)),    # [Wm|Wl]^T (resident)
            pl.BlockSpec((E2, 1), lambda i: (0, 0)),    # [bm|bl]^T (resident, f32)
        ],
        out_specs=pl.BlockSpec((E2, tb), lambda i: (0, i)),
        compiler_params=pltpu.CompilerParams(
            dimension_semantics=("parallel",),          # megacore sharding on v7x
        ),
        cost_estimate=cost,
    )(xt, yt, w1xt, w1yt, b1t, wht, bht)
    return out_t


def encoder_forward(x, y, params, *, compute_dtype=jnp.bfloat16, max_tile=2048,
                    use_pallas=None):
    """x: (B, inputsz), y: (B, numclass) -> (mean, logvar), each (B, embeddingsz)."""
    B = x.shape[0]
    if use_pallas is None:
        # At tiny batches the fixed pallas_call / pipeline cost exceeds the
        # math; let XLA fuse dot+softplus+dot instead.
        use_pallas = B >= 512
    if not use_pallas:
        return _reference_forward(x, y, params)

    out_t = _encoder_pallas(x, y, params, compute_dtype=compute_dtype,
                            max_tile=max_tile)
    E = out_t.shape[0] // 2
    # Back to the module's (B, E) interface.  A fused consumer would read the
    # (2E, B) slab from `_encoder_pallas` directly and skip this transpose.
    return out_t[:E, :].T, out_t[E:, :].T


def init_encoder_params(key, inputsz, numclass, hiddensz, embeddingsz):
    """Deterministic synthetic init (nn.Linear-style), stored pre-transposed /
    pre-fused for the transposed kernel:
      W1 split along its input axis into W1x^T (H, inputsz) / W1y^T (H, numclass),
      head weights/biases concatenated along the output axis and transposed."""
    d_in = inputsz + numclass
    k1, k2, k3 = jax.random.split(key, 3)

    def lin(k, fan_in, fan_out):
        kw, kb = jax.random.split(k)
        bound = 1.0 / jnp.sqrt(fan_in)
        w = jax.random.uniform(kw, (fan_in, fan_out), jnp.float32, -bound, bound)
        b = jax.random.uniform(kb, (1, fan_out), jnp.float32, -bound, bound)
        return w, b

    w1, b1 = lin(k1, d_in, hiddensz)
    wm, bm = lin(k2, hiddensz, embeddingsz)
    wl, bl = lin(k3, hiddensz, embeddingsz)

    return dict(
        w1x_t=w1[:inputsz, :].T,                        # (H, inputsz)
        w1y_t=w1[inputsz:, :].T,                        # (H, numclass)
        b1_t=b1.T,                                      # (H, 1)
        wh_t=jnp.concatenate([wm, wl], axis=1).T,       # (2E, H)
        bh_t=jnp.concatenate([bm, bl], axis=1).T,       # (2E, 1)
    )


def _reference_forward(x, y, params):
    """Pure-JAX (f32) reference matching the PyTorch module."""
    w1 = jnp.concatenate([params["w1x_t"], params["w1y_t"]], axis=1).T  # (d_in, H)
    xy = jnp.concatenate([x, y], axis=1)
    h = jax.nn.softplus(xy @ w1 + params["b1_t"].T)
    heads = h @ params["wh_t"].T + params["bh_t"].T
    E = heads.shape[1] // 2
    return heads[:, :E], heads[:, E:]


if __name__ == "__main__":
    inputsz, numclass, hiddensz, embeddingsz = 16, 4, 32, 8

    key = jax.random.PRNGKey(0)
    kx, ky, kp = jax.random.split(key, 3)
    params = init_encoder_params(kp, inputsz, numclass, hiddensz, embeddingsz)

    # --- small batch, force the Pallas path, f32 compute (tight check) -------
    batch = 8
    x = jax.random.normal(kx, (batch, inputsz), jnp.float32)
    labels = jax.random.randint(ky, (batch,), 0, numclass)
    y = jax.nn.one_hot(labels, numclass, dtype=jnp.float32)

    mean, logvar = encoder_forward(x, y, params, compute_dtype=jnp.float32,
                                   use_pallas=True)
    jax.block_until_ready((mean, logvar))

    ref_mean, ref_logvar = _reference_forward(x, y, params)
    assert mean.shape == (batch, embeddingsz)
    assert logvar.shape == (batch, embeddingsz)
    assert jnp.allclose(mean, ref_mean, atol=1e-4, rtol=1e-4)
    assert jnp.allclose(logvar, ref_logvar, atol=1e-4, rtol=1e-4)

    # --- larger batch: default path (Pallas, bf16 operands, even 2-step grid) -
    batch_l = 512
    kx2, ky2 = jax.random.split(kx)
    xl = jax.random.normal(kx2, (batch_l, inputsz), jnp.float32)
    yl = jax.nn.one_hot(jax.random.randint(ky2, (batch_l,), 0, numclass),
                        numclass, dtype=jnp.float32)

    mean_l, logvar_l = encoder_forward(xl, yl, params)   # bf16 matmul operands
    jax.block_until_ready((mean_l, logvar_l))

    ref_mean_l, ref_logvar_l = _reference_forward(xl, yl, params)
    assert mean_l.shape == (batch_l, embeddingsz)
    assert logvar_l.shape == (batch_l, embeddingsz)
    assert jnp.allclose(mean_l, ref_mean_l, atol=5e-2, rtol=5e-2)
    assert jnp.allclose(logvar_l, ref_logvar_l, atol=5e-2, rtol=5e-2)

    print("KERNEL_OK")
</pallas_src>

<mosaic_0001>
module attributes {stable_mosaic.version = 11 : i64} {
  func.func @_encoder_kernel_t(%arg0: i32, %arg1: memref<16x8xf32, #tpu.memory_space<vmem>>, %arg2: memref<4x8xf32, #tpu.memory_space<vmem>>, %arg3: memref<32x16xf32, #tpu.memory_space<vmem>>, %arg4: memref<32x4xf32, #tpu.memory_space<vmem>>, %arg5: memref<32x1xf32, #tpu.memory_space<vmem>>, %arg6: memref<16x32xf32, #tpu.memory_space<vmem>>, %arg7: memref<16x1xf32, #tpu.memory_space<vmem>>, %arg8: memref<16x8xf32, #tpu.memory_space<vmem>>) attributes {dimension_semantics = [#tpu.dimension_semantics<parallel>], iteration_bounds = array<i64: 1>, scalar_prefetch = 0 : i64, scratch_operands = 0 : i64, tpu.core_type = #tpu.core_type<tc>, window_params = [{transform_indices = @transform_0, window_bounds = array<i64: 16, 8>}, {transform_indices = @transform_1, window_bounds = array<i64: 4, 8>}, {pipeline_mode = #tpu.pipeline_mode<synchronous>, transform_indices = @transform_2, window_bounds = array<i64: 32, 16>}, {pipeline_mode = #tpu.pipeline_mode<synchronous>, transform_indices = @transform_3, window_bounds = array<i64: 32, 4>}, {pipeline_mode = #tpu.pipeline_mode<synchronous>, transform_indices = @transform_4, window_bounds = array<i64: 32, 1>}, {pipeline_mode = #tpu.pipeline_mode<synchronous>, transform_indices = @transform_5, window_bounds = array<i64: 16, 32>}, {pipeline_mode = #tpu.pipeline_mode<synchronous>, transform_indices = @transform_6, window_bounds = array<i64: 16, 1>}, {transform_indices = @transform_7, window_bounds = array<i64: 16, 8>}]} {
    %c0 = arith.constant 0 : index
    %c0_0 = arith.constant 0 : index
    %0 = vector.load %arg3[%c0, %c0_0] : memref<32x16xf32, #tpu.memory_space<vmem>>, vector<32x16xf32>
    %c0_1 = arith.constant 0 : index
    %c0_2 = arith.constant 0 : index
    %1 = vector.load %arg1[%c0_1, %c0_2] : memref<16x8xf32, #tpu.memory_space<vmem>>, vector<16x8xf32>
    %cst = arith.constant dense<0.000000e+00> : vector<32x8xf32>
    %2 = tpu.matmul %0, %1, %cst {dimension_numbers = #tpu.dot_dimension_numbers<[1], [0], [0], [1], [0, 0, 1, 1], [], []>} : vector<32x16xf32>, vector<16x8xf32>, vector<32x8xf32> -> vector<32x8xf32>
    %c0_3 = arith.constant 0 : index
    %c0_4 = arith.constant 0 : index
    %3 = vector.load %arg4[%c0_3, %c0_4] : memref<32x4xf32, #tpu.memory_space<vmem>>, vector<32x4xf32>
    %c0_5 = arith.constant 0 : index
    %c0_6 = arith.constant 0 : index
    %4 = vector.load %arg2[%c0_5, %c0_6] : memref<4x8xf32, #tpu.memory_space<vmem>>, vector<4x8xf32>
    %cst_7 = arith.constant dense<0.000000e+00> : vector<32x8xf32>
    %5 = tpu.matmul %3, %4, %cst_7 {dimension_numbers = #tpu.dot_dimension_numbers<[1], [0], [0], [1], [0, 0, 1, 1], [], []>} : vector<32x4xf32>, vector<4x8xf32>, vector<32x8xf32> -> vector<32x8xf32>
    %6 = arith.addf %2, %5 : vector<32x8xf32>
    %c0_8 = arith.constant 0 : index
    %c0_9 = arith.constant 0 : index
    %7 = vector.load %arg5[%c0_8, %c0_9] : memref<32x1xf32, #tpu.memory_space<vmem>>, vector<32x1xf32>
    %8 = vector.broadcast %7 : vector<32x1xf32> to vector<32x8xf32>
    %9 = arith.addf %6, %8 : vector<32x8xf32>
    %cst_10 = arith.constant 0.000000e+00 : f32
    %10 = vector.broadcast %cst_10 : f32 to vector<32x8xf32>
    %11 = arith.maximumf %9, %10 : vector<32x8xf32>
    %12 = math.absf %9 : vector<32x8xf32>
    %cst_11 = arith.constant 0.000000e+00 : f32
    %13 = vector.broadcast %cst_11 : f32 to vector<32x8xf32>
    %14 = arith.subf %13, %12 : vector<32x8xf32>
    %15 = math.exp %14 : vector<32x8xf32>
    %16 = math.log1p %15 : vector<32x8xf32>
    %17 = arith.addf %11, %16 : vector<32x8xf32>
    %c0_12 = arith.constant 0 : index
    %c0_13 = arith.constant 0 : index
    %18 = vector.load %arg6[%c0_12, %c0_13] : memref<16x32xf32, #tpu.memory_space<vmem>>, vector<16x32xf32>
    %cst_14 = arith.constant dense<0.000000e+00> : vector<16x8xf32>
    %19 = tpu.matmul %18, %17, %cst_14 {dimension_numbers = #tpu.dot_dimension_numbers<[1], [0], [0], [1], [0, 0, 1, 1], [], []>} : vector<16x32xf32>, vector<32x8xf32>, vector<16x8xf32> -> vector<16x8xf32>
    %c0_15 = arith.constant 0 : index
    %c0_16 = arith.constant 0 : index
    %20 = vector.load %arg7[%c0_15, %c0_16] : memref<16x1xf32, #tpu.memory_space<vmem>>, vector<16x1xf32>
    %21 = vector.broadcast %20 : vector<16x1xf32> to vector<16x8xf32>
    %22 = arith.addf %19, %21 : vector<16x8xf32>
    %c0_17 = arith.constant 0 : index
    %c0_18 = arith.constant 0 : index
    %23 = vector.load %arg8[%c0_17, %c0_18] : memref<16x8xf32, #tpu.memory_space<vmem>>, vector<16x8xf32>
    tpu.vector_store %arg8[%c0_17, %c0_18], %22 {strides = array<i32>} : memref<16x8xf32, #tpu.memory_space<vmem>>, vector<16x8xf32>,
    return
  }
  func.func @transform_0(%arg0: i32) -> (i32, i32) {
    %c0_i32 = arith.constant 0 : i32
    %c0_i32_0 = arith.constant 0 : i32
    return %c0_i32, %arg0 : i32, i32
  }
  func.func @transform_1(%arg0: i32) -> (i32, i32) {
    %c0_i32 = arith.constant 0 : i32
    %c0_i32_0 = arith.constant 0 : i32
    return %c0_i32, %arg0 : i32, i32
  }
  func.func @transform_2(%arg0: i32) -> (i32, i32) {
    %c0_i32 = arith.constant 0 : i32
    %c0_i32_0 = arith.constant 0 : i32
    %c0_i32_1 = arith.constant 0 : i32
    return %c0_i32, %c0_i32_0 : i32, i32
  }
  func.func @transform_3(%arg0: i32) -> (i32, i32) {
    %c0_i32 = arith.constant 0 : i32
    %c0_i32_0 = arith.constant 0 : i32
    %c0_i32_1 = arith.constant 0 : i32
    return %c0_i32, %c0_i32_0 : i32, i32
  }
  func.func @transform_4(%arg0: i32) -> (i32, i32) {
    %c0_i32 = arith.constant 0 : i32
    %c0_i32_0 = arith.constant 0 : i32
    %c0_i32_1 = arith.constant 0 : i32
    return %c0_i32, %c0_i32_0 : i32, i32
  }
  func.func @transform_5(%arg0: i32) -> (i32, i32) {
    %c0_i32 = arith.constant 0 : i32
    %c0_i32_0 = arith.constant 0 : i32
    %c0_i32_1 = arith.constant 0 : i32
    return %c0_i32, %c0_i32_0 : i32, i32
  }
  func.func @transform_6(%arg0: i32) -> (i32, i32) {
    %c0_i32 = arith.constant 0 : i32
    %c0_i32_0 = arith.constant 0 : i32
    %c0_i32_1 = arith.constant 0 : i32
    return %c0_i32, %c0_i32_0 : i32, i32
  }
  func.func @transform_7(%arg0: i32) -> (i32, i32) {
    %c0_i32 = arith.constant 0 : i32
    %c0_i32_0 = arith.constant 0 : i32
    return %c0_i32, %arg0 : i32, i32
  }
}

</mosaic_0001>

<llo_original>
// kernel: tpu_custom_call.1
$region0: #{tpu_custom_call.1}
  #allocation0 [shape = 'u32[]', space=smem, size = 0x4, offset = 0x4, fixed_abs, tag = 'smem constant byte address 0x4 - core index']
  #allocation1 [shape = 'u32[144,128]{1,0:T(1,128)}', space=vmem, size = 0x12000, scoped, tag = 'internal scratch']
  %s0 = inlined_call_operand.vmem [shape: f32[16,8], index: 0, kind: input, shape index: {}]
  %s1 = inlined_call_operand.vmem [shape: f32[4,8], index: 1, kind: input, shape index: {}]
  %s2 = inlined_call_operand.vmem [shape: f32[32,16], index: 2, kind: input, shape index: {}]
  %s3 = inlined_call_operand.vmem [shape: f32[32,4], index: 3, kind: input, shape index: {}]
  %s4 = inlined_call_operand.vmem [shape: f32[32,1], index: 4, kind: input, shape index: {}]
  %s5 = inlined_call_operand.vmem [shape: f32[16,32], index: 5, kind: input, shape index: {}]
  %s6 = inlined_call_operand.vmem [shape: f32[16,1], index: 6, kind: input, shape index: {}]
  %s7 = inlined_call_operand.vmem [shape: f32[16,8], index: 7, kind: output, shape index: {}]
  %s8 = sld [smem:[#allocation0]]
  $region38: #{tpu_custom_call.1} parent=0
    _
  %s10 = ssub.s32 1, %s8
  %s11 = scalar_select 0, %s10, %s8
  // Predicated region
  $region2: #{tpu_custom_call.1} parent=0 // pred_check
    _
  $region3: #{tpu_custom_call.1} parent=0 // pred_check_branch
    %13 = sbr.rel (0) target = $region5
  $region4: #{tpu_custom_call.1} parent=0 // pred_region
    _
  $region5: #{tpu_custom_call.1} parent=0 // pred_fallthru
    _
  // Predicated region
  $region6: #{tpu_custom_call.1} parent=0 // pred_check
    _
  $region7: #{tpu_custom_call.1} parent=0 // pred_check_branch
    %15 = sbr.rel (0) target = $region9
  $region8: #{tpu_custom_call.1} parent=0 // pred_region
    _
  $region9: #{tpu_custom_call.1} parent=0 // pred_fallthru
    _
  // Predicated region
  $region10: #{tpu_custom_call.1} parent=0 // pred_check
    _
  $region11: #{tpu_custom_call.1} parent=0 // pred_check_branch
    %17 = sbr.rel (0) target = $region13
  $region12: #{tpu_custom_call.1} parent=0 // pred_region
    _
  $region13: #{tpu_custom_call.1} parent=0 // pred_fallthru
    _
  // Predicated region
  $region14: #{tpu_custom_call.1} parent=0 // pred_check
    _
  $region15: #{tpu_custom_call.1} parent=0 // pred_check_branch
    %19 = sbr.rel (0) target = $region17
  $region16: #{tpu_custom_call.1} parent=0 // pred_region
    _
  $region17: #{tpu_custom_call.1} parent=0 // pred_fallthru
    _
  // Predicated region
  $region18: #{tpu_custom_call.1} parent=0 // pred_check
    _
  $region19: #{tpu_custom_call.1} parent=0 // pred_check_branch
    %21 = sbr.rel (0) target = $region21
  $region20: #{tpu_custom_call.1} parent=0 // pred_region
    _
  $region21: #{tpu_custom_call.1} parent=0 // pred_fallthru
    _
  // Predicated region
  $region22: #{tpu_custom_call.1} parent=0 // pred_check
    _
  $region23: #{tpu_custom_call.1} parent=0 // pred_check_branch
    %23 = sbr.rel (0) target = $region25
  $region24: #{tpu_custom_call.1} parent=0 // pred_region
    _
  $region25: #{tpu_custom_call.1} parent=0 // pred_fallthru
    _
  // Predicated region
  $region26: #{tpu_custom_call.1} parent=0 // pred_check
    _
  $region27: #{tpu_custom_call.1} parent=0 // pred_check_branch
    %25 = sbr.rel (0) target = $region29
  $region28: #{tpu_custom_call.1} parent=0 // pred_region
    _
  $region29: #{tpu_custom_call.1} parent=0 // pred_fallthru
    _
  %v26 = vld [vmem:[%s2] sm:$0xff]
  %v27 = vld [vmem:[%s2 + $0x8] sm:$0xff]
  %v28 = vld [vmem:[%s2 + $0x10] sm:$0xff]
  %v29 = vld [vmem:[%s2 + $0x18] sm:$0xff]
  %v30 = vld [vmem:[%s0] sm:$0xff]
  %v31 = vld [vmem:[%s0 + $0x8] sm:$0xff]
  %v32 = vld [vmem:[%s3] sm:$0xff]
  %v33 = vld [vmem:[%s3 + $0x8] sm:$0xff]
  %v34 = vld [vmem:[%s3 + $0x10] sm:$0xff]
  %v35 = vld [vmem:[%s3 + $0x18] sm:$0xff]
  %v36 = vld [vmem:[%s1] sm:$0xf]
  %vm37 = vcmask 31744
  %v39 = vsel %vm37, %v32, 0
  %v42 = vsel %vm37, %v33, 0
  %v45 = vsel %vm37, %v34, 0
  %v48 = vsel %vm37, %v35, 0
  %vm50 = vcmask 1043456
  %v52 = vsel %vm50, %v36, 0
  %54 = vmatprep.subr.mxu0 0.0
  %55 = vmatpush1.msra.mxu0 0.0
  %56 = vmatprep.subr.mxu0 0.0
  %57 = vmatpush1.msra.mxu0 0.0
  %58 = vmatprep.subr.mxu0 0.0
  %59 = vmatpush1.msra.mxu0 0.0
  %60 = vmatprep.subr.mxu0 0.0
  %61 = vmatpush1.msra.mxu0 0.0
  %62 = vmatprep.subr.mxu0 0.0
  %63 = vmatpush1.msra.mxu0 0.0
  %64 = vmatprep.subr.mxu0 0.0
  %65 = vmatpush1.msra.mxu0 0.0
  %66 = vmatprep.subr.mxu0 0.0
  %67 = vmatpush1.msra.mxu0 0.0
  %68 = vmatprep.subr.mxu0 0.0
  %69 = vmatpush1.msra.mxu0 0.0
  %70 = vmatprep.subr.mxu0 0.0
  %71 = vmatpush1.msra.mxu0 0.0
  %72 = vmatprep.subr.mxu0 0.0
  %73 = vmatpush1.msra.mxu0 0.0
  %74 = vmatprep.subr.mxu0 0.0
  %75 = vmatpush1.msra.mxu0 0.0
  %76 = vmatprep.subr.mxu0 0.0
  %77 = vmatpush1.msra.mxu0 0.0
  %78 = vmatprep.subr.mxu0 0.0
  %79 = vmatpush1.msra.mxu0 0.0
  %80 = vmatprep.subr.mxu0 0.0
  %81 = vmatpush1.msra.mxu0 0.0
  %82 = vmatprep.subr.mxu0 0.0
  %83 = vmatpush1.msra.mxu0 0.0
  %84 = vmatprep.subr.mxu0 0.0
  %85 = vmatpush1.msra.mxu0 %v52
  %86 = vmatprep.subr.mxu0 0.0
  %87 = vmatpush2.msra.mxu0 0.0
  %88 = vmatprep.subr.mxu0 0.0
  %89 = vmatpush2.msra.mxu0 0.0
  %90 = vmatprep.subr.mxu0 0.0
  %91 = vmatpush2.msra.mxu0 0.0
  %92 = vmatprep.subr.mxu0 0.0
  %93 = vmatpush2.msra.mxu0 0.0
  %94 = vmatprep.subr.mxu0 0.0
  %95 = vmatpush2.msra.mxu0 0.0
  %96 = vmatprep.subr.mxu0 0.0
  %97 = vmatpush2.msra.mxu0 0.0
  %98 = vmatprep.subr.mxu0 0.0
  %99 = vmatpush2.msra.mxu0 0.0
  %100 = vmatprep.subr.mxu0 0.0
  %101 = vmatpush2.msra.mxu0 0.0
  %102 = vmatprep.subr.mxu0 0.0
  %103 = vmatpush2.msra.mxu0 0.0
  %104 = vmatprep.subr.mxu0 0.0
  %105 = vmatpush2.msra.mxu0 0.0
  %106 = vmatprep.subr.mxu0 0.0
  %107 = vmatpush2.msra.mxu0 0.0
  %108 = vmatprep.subr.mxu0 0.0
  %109 = vmatpush2.msra.mxu0 0.0
  %110 = vmatprep.subr.mxu0 0.0
  %111 = vmatpush2.msra.mxu0 0.0
  %112 = vmatprep.subr.mxu0 0.0
  %113 = vmatpush2.msra.mxu0 0.0
  %114 = vmatprep.subr.mxu0 0.0
  %115 = vmatpush2.msra.mxu0 0.0
  %116 = vmatprep.subr.mxu0 0.0
  %117 = vmatpush2.msra.mxu0 0.0
  %118 = vmatprep.mubr.f32.mxu0 0.0
  %119 = vmatmul.mubr.f32.gmra.mxu0 %v39
  %v120 = vpop.f32.mrf.mxu0
  %v121 = vadd.f32 0.0, %v120
  %v122 = vpop.f32.mrf.mxu0
  %123 = vmatprep.mubr.f32.mxu0 0.0
  %124 = vmatmul.mubr.f32.gmra.mxu0 %v42
  %v125 = vpop.f32.mrf.mxu0
  %v126 = vadd.f32 0.0, %v125
  %v127 = vpop.f32.mrf.mxu0
  %128 = vmatprep.mubr.f32.mxu0 0.0
  %129 = vmatmul.mubr.f32.gmra.mxu0 %v45
  %v130 = vpop.f32.mrf.mxu0
  %v131 = vadd.f32 0.0, %v130
  %v132 = vpop.f32.mrf.mxu0
  %133 = vmatprep.mubr.f32.mxu0 0.0
  %134 = vmatmul.mubr.f32.gmra.mxu0 %v48
  %v135 = vpop.f32.mrf.mxu0
  %v136 = vadd.f32 0.0, %v135
  %v137 = vpop.f32.mrf.mxu0
  %138 = vdwg.mxu0
  %vm139 = vcmask 130048
  %v141 = vsel %vm139, %v26, 0
  %v144 = vsel %vm139, %v27, 0
  %v147 = vsel %vm139, %v28, 0
  %v150 = vsel %vm139, %v29, 0
  %152 = vmatprep.subr.mxu0 0.0
  %153 = vmatpush1.msra.mxu0 0.0
  %154 = vmatprep.subr.mxu0 0.0
  %155 = vmatpush1.msra.mxu0 0.0
  %156 = vmatprep.subr.mxu0 0.0
  %157 = vmatpush1.msra.mxu0 0.0
  %158 = vmatprep.subr.mxu0 0.0
  %159 = vmatpush1.msra.mxu0 0.0
  %160 = vmatprep.subr.mxu0 0.0
  %161 = vmatpush1.msra.mxu0 0.0
  %162 = vmatprep.subr.mxu0 0.0
  %163 = vmatpush1.msra.mxu0 0.0
  %164 = vmatprep.subr.mxu0 0.0
  %165 = vmatpush1.msra.mxu0 0.0
  %166 = vmatprep.subr.mxu0 0.0
  %167 = vmatpush1.msra.mxu0 0.0
  %168 = vmatprep.subr.mxu0 0.0
  %169 = vmatpush1.msra.mxu0 0.0
  %170 = vmatprep.subr.mxu0 0.0
  %171 = vmatpush1.msra.mxu0 0.0
  %172 = vmatprep.subr.mxu0 0.0
  %173 = vmatpush1.msra.mxu0 0.0
  %174 = vmatprep.subr.mxu0 0.0
  %175 = vmatpush1.msra.mxu0 0.0
  %176 = vmatprep.subr.mxu0 0.0
  %177 = vmatpush1.msra.mxu0 0.0
  %178 = vmatprep.subr.mxu0 0.0
  %179 = vmatpush1.msra.mxu0 0.0
  %180 = vmatprep.subr.mxu0 0.0
  %181 = vmatpush1.msra.mxu0 %v31
  %182 = vmatprep.subr.mxu0 0.0
  %183 = vmatpush1.msra.mxu0 %v30
  %184 = vmatprep.subr.mxu0 0.0
  %185 = vmatpush2.msra.mxu0 0.0
  %186 = vmatprep.subr.mxu0 0.0
  %187 = vmatpush2.msra.mxu0 0.0
  %188 = vmatprep.subr.mxu0 0.0
  %189 = vmatpush2.msra.mxu0 0.0
  %190 = vmatprep.subr.mxu0 0.0
  %191 = vmatpush2.msra.mxu0 0.0
  %192 = vmatprep.subr.mxu0 0.0
  %193 = vmatpush2.msra.mxu0 0.0
  %194 = vmatprep.subr.mxu0 0.0
  %195 = vmatpush2.msra.mxu0 0.0
  %196 = vmatprep.subr.mxu0 0.0
  %197 = vmatpush2.msra.mxu0 0.0
  %198 = vmatprep.subr.mxu0 0.0
  %199 = vmatpush2.msra.mxu0 0.0
  %200 = vmatprep.subr.mxu0 0.0
  %201 = vmatpush2.msra.mxu0 0.0
  %202 = vmatprep.subr.mxu0 0.0
  %203 = vmatpush2.msra.mxu0 0.0
  %204 = vmatprep.subr.mxu0 0.0
  %205 = vmatpush2.msra.mxu0 0.0
  %206 = vmatprep.subr.mxu0 0.0
  %207 = vmatpush2.msra.mxu0 0.0
  %208 = vmatprep.subr.mxu0 0.0
  %209 = vmatpush2.msra.mxu0 0.0
  %210 = vmatprep.subr.mxu0 0.0
  %211 = vmatpush2.msra.mxu0 0.0
  %212 = vmatprep.subr.mxu0 0.0
  %213 = vmatpush2.msra.mxu0 0.0
  %214 = vmatprep.subr.mxu0 0.0
  %215 = vmatpush2.msra.mxu0 0.0
  %216 = vmatprep.mubr.f32.mxu0 0.0
  %217 = vmatmul.mubr.f32.gmra.mxu0 %v141
  %v218 = vpop.f32.mrf.mxu0
  %v219 = vadd.f32 %v121, %v218
  %v220 = vpop.f32.mrf.mxu0
  %221 = vmatprep.mubr.f32.mxu0 0.0
  %222 = vmatmul.mubr.f32.gmra.mxu0 %v144
  %v223 = vpop.f32.mrf.mxu0
  %v224 = vadd.f32 %v126, %v223
  %v225 = vpop.f32.mrf.mxu0
  %226 = vmatprep.mubr.f32.mxu0 0.0
  %227 = vmatmul.mubr.f32.gmra.mxu0 %v147
  %v228 = vpop.f32.mrf.mxu0
  %v229 = vadd.f32 %v131, %v228
  %v230 = vpop.f32.mrf.mxu0
  %231 = vmatprep.mubr.f32.mxu0 0.0
  %232 = vmatmul.mubr.f32.gmra.mxu0 %v150
  %v233 = vpop.f32.mrf.mxu0
  %v234 = vadd.f32 %v136, %v233
  %v235 = vpop.f32.mrf.mxu0
  %236 = vdwg.mxu0
  %v237 = vld [vmem:[%s4] sm:$0xff]
  %v238 = vld [vmem:[%s4 + $0x8] sm:$0xff]
  %v239 = vld [vmem:[%s4 + $0x10] sm:$0xff]
  %v240 = vld [vmem:[%s4 + $0x18] sm:$0xff]
  %242 = vset.pattern.permute.xlu0 0
  %243 = vperm.xlu0 %242, %v237
  %v244 = vpop.permute.xlu0 %243
  %247 = vset.pattern.permute.xlu0 0
  %248 = vperm.xlu0 %247, %v238
  %v249 = vpop.permute.xlu0 %248
  %252 = vset.pattern.permute.xlu0 0
  %253 = vperm.xlu0 %252, %v239
  %v254 = vpop.permute.xlu0 %253
  %257 = vset.pattern.permute.xlu0 0
  %258 = vperm.xlu0 %257, %v240
  %v259 = vpop.permute.xlu0 %258
  %v261 = vadd.f32 %v219, %v244
  %v262 = vadd.f32 %v224, %v249
  %v263 = vadd.f32 %v229, %v254
  %v264 = vadd.f32 %v234, %v259
  %v265 = vmax.f32 %v261, 0.0
  %v266 = vmax.f32 %v262, 0.0
  %v267 = vmax.f32 %v263, 0.0
  %v268 = vmax.f32 %v264, 0.0
  %v269 = vand.u32 2147483647, %v261
  %v270 = vand.u32 2147483647, %v262
  %v271 = vand.u32 2147483647, %v263
  %v272 = vand.u32 2147483647, %v264
  %v273 = vsub.f32 0.0, %v269
  %v274 = vsub.f32 0.0, %v270
  %v275 = vsub.f32 0.0, %v271
  %v276 = vsub.f32 0.0, %v272
  %v277 = vmul.f32 %v273, 1.442695
  %v278 = vpow.pop %v277
  %v279 = vmul.f32 %v274, 1.442695
  %v280 = vpow.pop %v279
  %v281 = vmul.f32 %v275, 1.442695
  %v282 = vpow.pop %v281
  %v283 = vmul.f32 %v276, 1.442695
  %v284 = vpow.pop %v283
  %v285 = vadd.f32 %v278, 1.0
  %v286 = vlog2.pop %v285
  %v287 = vmul.f32 %v286, 0.6931472
  %v288 = vmul.f32 -0.5, %v278
  %v289 = vadd.f32 %v288, 1.0
  %v290 = vmul.f32 %v289, %v278
  %v291 = vand.u32 2147483647, %v278
  %vm292 = vcmp.lt.f32.partialorder %v291, 0.0004427343
  %v293 = vsel %vm292, %v290, %v287
  %v294 = vadd.f32 %v280, 1.0
  %v295 = vlog2.pop %v294
  %v296 = vmul.f32 %v295, 0.6931472
  %v297 = vmul.f32 -0.5, %v280
  %v298 = vadd.f32 %v297, 1.0
  %v299 = vmul.f32 %v298, %v280
  %v300 = vand.u32 2147483647, %v280
  %vm301 = vcmp.lt.f32.partialorder %v300, 0.0004427343
  %v302 = vsel %vm301, %v299, %v296
  %v303 = vadd.f32 %v282, 1.0
  %v304 = vlog2.pop %v303
  %v305 = vmul.f32 %v304, 0.6931472
  %v306 = vmul.f32 -0.5, %v282
  %v307 = vadd.f32 %v306, 1.0
  %v308 = vmul.f32 %v307, %v282
  %v309 = vand.u32 2147483647, %v282
  %vm310 = vcmp.lt.f32.partialorder %v309, 0.0004427343
  %v311 = vsel %vm310, %v308, %v305
  %v312 = vadd.f32 %v284, 1.0
  %v313 = vlog2.pop %v312
  %v314 = vmul.f32 %v313, 0.6931472
  %v315 = vmul.f32 -0.5, %v284
  %v316 = vadd.f32 %v315, 1.0
  %v317 = vmul.f32 %v316, %v284
  %v318 = vand.u32 2147483647, %v284
  %vm319 = vcmp.lt.f32.partialorder %v318, 0.0004427343
  %v320 = vsel %vm319, %v317, %v314
  %v321 = vadd.f32 %v265, %v293
  %v322 = vadd.f32 %v266, %v302
  %v323 = vadd.f32 %v267, %v311
  %v324 = vadd.f32 %v268, %v320
  %v325 = vld [vmem:[%s5] sm:$0xff]
  %v326 = vld [vmem:[%s5 + $0x8] sm:$0xff]
  %v327 = vld [vmem:[%s6] sm:$0xff]
  %v328 = vld [vmem:[%s6 + $0x8] sm:$0xff]
  %330 = vset.pattern.permute.xlu0 0
  %331 = vperm.xlu0 %330, %v327
  %v332 = vpop.permute.xlu0 %331
  %335 = vset.pattern.permute.xlu0 0
  %336 = vperm.xlu0 %335, %v328
  %v337 = vpop.permute.xlu0 %336
  %vm339 = vcmask 261120
  %v341 = vsel %vm339, %v325, 0
  %v344 = vsel %vm339, %v326, 0
  %346 = vmatprep.subr.mxu0 0.0
  %347 = vmatpush1.msra.mxu0 0.0
  %348 = vmatprep.subr.mxu0 0.0
  %349 = vmatpush1.msra.mxu0 0.0
  %350 = vmatprep.subr.mxu0 0.0
  %351 = vmatpush1.msra.mxu0 0.0
  %352 = vmatprep.subr.mxu0 0.0
  %353 = vmatpush1.msra.mxu0 0.0
  %354 = vmatprep.subr.mxu0 0.0
  %355 = vmatpush1.msra.mxu0 0.0
  %356 = vmatprep.subr.mxu0 0.0
  %357 = vmatpush1.msra.mxu0 0.0
  %358 = vmatprep.subr.mxu0 0.0
  %359 = vmatpush1.msra.mxu0 0.0
  %360 = vmatprep.subr.mxu0 0.0
  %361 = vmatpush1.msra.mxu0 0.0
  %362 = vmatprep.subr.mxu0 0.0
  %363 = vmatpush1.msra.mxu0 0.0
  %364 = vmatprep.subr.mxu0 0.0
  %365 = vmatpush1.msra.mxu0 0.0
  %366 = vmatprep.subr.mxu0 0.0
  %367 = vmatpush1.msra.mxu0 0.0
  %368 = vmatprep.subr.mxu0 0.0
  %369 = vmatpush1.msra.mxu0 0.0
  %370 = vmatprep.subr.mxu0 0.0
  %371 = vmatpush1.msra.mxu0 %v324
  %372 = vmatprep.subr.mxu0 0.0
  %373 = vmatpush1.msra.mxu0 %v323
  %374 = vmatprep.subr.mxu0 0.0
  %375 = vmatpush1.msra.mxu0 %v322
  %376 = vmatprep.subr.mxu0 0.0
  %377 = vmatpush1.msra.mxu0 %v321
  %378 = vmatprep.subr.mxu0 0.0
  %379 = vmatpush2.msra.mxu0 0.0
  %380 = vmatprep.subr.mxu0 0.0
  %381 = vmatpush2.msra.mxu0 0.0
  %382 = vmatprep.subr.mxu0 0.0
  %383 = vmatpush2.msra.mxu0 0.0
  %384 = vmatprep.subr.mxu0 0.0
  %385 = vmatpush2.msra.mxu0 0.0
  %386 = vmatprep.subr.mxu0 0.0
  %387 = vmatpush2.msra.mxu0 0.0
  %388 = vmatprep.subr.mxu0 0.0
  %389 = vmatpush2.msra.mxu0 0.0
  %390 = vmatprep.subr.mxu0 0.0
  %391 = vmatpush2.msra.mxu0 0.0
  %392 = vmatprep.subr.mxu0 0.0
  %393 = vmatpush2.msra.mxu0 0.0
  %394 = vmatprep.subr.mxu0 0.0
  %395 = vmatpush2.msra.mxu0 0.0
  %396 = vmatprep.subr.mxu0 0.0
  %397 = vmatpush2.msra.mxu0 0.0
  %398 = vmatprep.subr.mxu0 0.0
  %399 = vmatpush2.msra.mxu0 0.0
  %400 = vmatprep.subr.mxu0 0.0
  %401 = vmatpush2.msra.mxu0 0.0
  %402 = vmatprep.subr.mxu0 0.0
  %403 = vmatpush2.msra.mxu0 0.0
  %404 = vmatprep.subr.mxu0 0.0
  %405 = vmatpush2.msra.mxu0 0.0
  %406 = vmatprep.subr.mxu0 0.0
  %407 = vmatpush2.msra.mxu0 0.0
  %408 = vmatprep.subr.mxu0 0.0
  %409 = vmatpush2.msra.mxu0 0.0
  %410 = vmatprep.mubr.f32.mxu0 0.0
  %411 = vmatmul.mubr.f32.gmra.mxu0 %v341
  %v412 = vpop.f32.mrf.mxu0
  %v413 = vadd.f32 %v332, %v412
  %v414 = vpop.f32.mrf.mxu0
  %415 = vmatprep.mubr.f32.mxu0 0.0
  %416 = vmatmul.mubr.f32.gmra.mxu0 %v344
  %v417 = vpop.f32.mrf.mxu0
  %v418 = vadd.f32 %v337, %v417
  %v419 = vpop.f32.mrf.mxu0
  %420 = vdwg.mxu0
  %vm421 = vcmask 64512
  %422 = vst.msk [vmem:[%s7] sm:$0xff] %vm421, %v413
  %423 = vst.msk [vmem:[%s7 + $0x8] sm:$0xff] %vm421, %v418
  // Predicated region
  $region30: #{tpu_custom_call.1} parent=0 // pred_check
    _
  $region31: #{tpu_custom_call.1} parent=0 // pred_check_branch
    %425 = sbr.rel (0) target = $region33
  $region32: #{tpu_custom_call.1} parent=0 // pred_region
    _
  $region33: #{tpu_custom_call.1} parent=0 // pred_fallthru
    _
  // Predicated region
  $region34: #{tpu_custom_call.1} parent=0 // pred_check
    _
  $region35: #{tpu_custom_call.1} parent=0 // pred_check_branch
    %427 = sbr.rel (0) target = $region37
  $region36: #{tpu_custom_call.1} parent=0 // pred_region
    _
  $region37: #{tpu_custom_call.1} parent=0 // pred_fallthru
    _

</llo_original>
